<compile_context>
chip_gen: v5e
topology: v5e:2x2
jax: 0.10.0
libtpu: 0.0.40
codegen_flags: <defaults>
</compile_context>

<pallas_src>
import functools

import jax
import jax.numpy as jnp
from jax import lax
from jax.experimental import pallas as pl
from jax.experimental.pallas import tpu as pltpu

_NEG_BIG = -1e10


def _round_up(x, m):
    return ((x + m - 1) // m) * m


def _cdiv(a, b):
    return -(-a // b)


def _tpu_generation():
    """Best-effort TPU generation from device_kind ('TPU v5e' -> 5, 'TPU7x' -> 7)."""
    try:
        kind = jax.devices()[0].device_kind.lower()
    except Exception:
        return 0
    for ch in kind:
        if ch.isdigit():
            return int(ch)
    return 0


# ---------------------------------------------------------------------------
# Kernels
# ---------------------------------------------------------------------------

def _attention_kernel_batched(hidden_ref, enc_ref, wh_t_ref, we_t_ref,
                              b_row_ref, v_row_ref, bias_ref, out_ref,
                              *, act_dtype):
    """Batched path (use when H >= 128; lane axis of the energy tensor is H).

    hidden_ref: (TB, H)   enc_ref: (TB, S_pad, E2)   [compute dtype]
    wh_t_ref:   (H, H)    we_t_ref: (H, E2)          [compute dtype, torch layout]
    b_row_ref / v_row_ref: (1, H) f32
    bias_ref:   (TB, S_pad) f32 additive mask (0 valid / -1e10 masked)
    out_ref:    (TB, S_pad)
    """
    TB, S_pad, E2 = enc_ref.shape
    H = wh_t_ref.shape[0]

    h = hidden_ref[...]
    e = enc_ref[...].reshape(TB * S_pad, E2)          # layout-preserving merge

    # energy = tanh([hidden ; enc] @ W_attn.T + b), as a split "A @ B.T" matmul
    # so the PyTorch (out, in) weight layout is used directly (f32 accumulate).
    nt = (((1,), (1,)), ((), ()))
    pre_enc = lax.dot_general(e, we_t_ref[...], nt,
                              preferred_element_type=jnp.float32)   # (TB*S_pad, H)
    pre_hid = lax.dot_general(h, wh_t_ref[...], nt,
                              preferred_element_type=jnp.float32)   # (TB, H)
    pre_hid = pre_hid + b_row_ref[...]
    pre = pre_enc.reshape(TB, S_pad, H) + pre_hid[:, None, :]

    # tanh in act_dtype (bf16 on v6e/v7x -> ~2x EUP); everything after in f32.
    energy = jnp.tanh(pre.astype(act_dtype)).astype(jnp.float32)

    # v-projection: VPU multiply + lane reduce over H (keeps the MXU free).
    v = v_row_ref[...]                                               # (1, H)
    score = jnp.sum(energy * v[None, :, :], axis=-1)                 # (TB, S_pad)

    # additive mask; padded src positions also carry -1e10.
    score = score + bias_ref[...]

    # softmax over src_len (lane axis), f32 throughout.
    m = jnp.max(score, axis=-1, keepdims=True)
    p = jnp.exp(score - m)
    denom = jnp.sum(p, axis=-1, keepdims=True)
    inv = pl.reciprocal(denom, approx=True)          # EUP
    inv = inv * (2.0 - denom * inv)                  # one Newton step -> ~f32
    out_ref[...] = (p * inv).astype(out_ref.dtype)


def _attention_kernel_rowwise(hidden_ref, enc_ref, wh_t_ref, we_t_ref,
                              b_col_ref, v_col_ref, bias_ref, out_ref,
                              *, act_dtype):
    """Row-wise lane-dense path (use when H < 128).

    Processes one batch row per inner-loop step; the energy tile is (H, S_pad)
    so every tanh/VPU vreg is fully populated even for small H, the
    v-projection is a sublane reduction, and the live f32 intermediate is only
    H*S_pad*4 bytes regardless of TB.

    hidden_ref: (TB, H)   enc_ref: (TB, S_pad, E2)   [compute dtype]
    wh_t_ref:   (H, H)    we_t_ref: (H, E2)          [compute dtype]
    b_col_ref / v_col_ref: (H, 1) f32
    bias_ref:   (TB, S_pad) f32 additive mask        out_ref: (TB, S_pad)
    """
    TB, S_pad, E2 = enc_ref.shape

    nt = (((1,), (1,)), ((), ()))
    we_t = we_t_ref[...]                              # (H, E2) compute dtype
    wh_t_f = wh_t_ref[...].astype(jnp.float32)        # (H, H)  f32 (tiny)
    b_col = b_col_ref[...]                            # (H, 1)  f32
    v_col = v_col_ref[...]                            # (H, 1)  f32

    @pl.loop(0, TB)
    def _(t):
        enc_t = enc_ref[t]                                            # (S_pad, E2)
        h_t = hidden_ref[pl.ds(t, 1), :].astype(jnp.float32)          # (1, H)

        # hidden projection for this row: (H, 1) = Wh @ h^T + b (tiny -> VPU)
        ph = jnp.sum(wh_t_f * h_t, axis=1, keepdims=True) + b_col

        # encoder projection: (H, S_pad) = We @ enc^T on the MXU, f32 accumulate
        pre = lax.dot_general(we_t, enc_t, nt,
                              preferred_element_type=jnp.float32)
        energy = jnp.tanh((pre + ph).astype(act_dtype)).astype(jnp.float32)

        # v-projection: sublane reduce over H -> (1, S_pad)
        score = jnp.sum(energy * v_col, axis=0, keepdims=True)
        score = score + bias_ref[pl.ds(t, 1), :]

        m = jnp.max(score, axis=-1, keepdims=True)
        p = jnp.exp(score - m)
        denom = jnp.sum(p, axis=-1, keepdims=True)
        inv = pl.reciprocal(denom, approx=True)
        inv = inv * (2.0 - denom * inv)
        out_ref[pl.ds(t, 1), :] = (p * inv).astype(out_ref.dtype)


# ---------------------------------------------------------------------------
# Wrapper
# ---------------------------------------------------------------------------

def _select_tile(B, S_pad, E2, H, itemsize, gen, batch_tile, rowwise):
    """Pick the batch tile TB (multiple of 8) from a per-generation VMEM budget."""
    if gen >= 7:
        vmem_limit = 48 * 1024 * 1024      # v7x: 64 MiB physical VMEM
        default_cap = 32
    elif gen in (5, 6):
        vmem_limit = 96 * 1024 * 1024      # v5e/v6e: 128 MiB physical VMEM
        default_cap = 128
    else:
        vmem_limit = None                  # unknown / older: compiler default
        default_cap = 64
    budget = int(0.7 * (vmem_limit if vmem_limit is not None else 32 * 1024 * 1024))

    # VMEM bytes per batch row per grid step: double-buffered enc stream +
    # mask bias + output, plus the f32 pre/energy intermediate for the batched
    # path (the row-wise path keeps that at H*S_pad*4 independent of TB).
    inter = 0 if rowwise else 2 * S_pad * H * 4
    per_row = 2 * S_pad * E2 * itemsize + 4 * S_pad * 4 + 2 * H * itemsize + inter

    cap = default_cap if batch_tile is None else int(batch_tile)
    tb = max(8, min(cap, budget // max(per_row, 1)))
    tb = max(8, (tb // 8) * 8)
    tb = min(tb, _round_up(B, 8))

    # >= 2 grid steps when the batch allows it (v7x megacore; cheap elsewhere).
    if _round_up(B, 8) >= 16:
        while tb > 8 and _cdiv(B, tb) < 2:
            tb = max(8, ((tb // 2) // 8) * 8)

    # limit dead padded batch rows to <= tb // 2.
    while tb > 8 and (_round_up(B, tb) - B) > tb // 2:
        tb -= 8
    return tb, vmem_limit


@functools.partial(
    jax.jit,
    static_argnames=("batch_tile", "compute_dtype", "out_dtype",
                     "encoder_batch_first"))
def attention_forward(hidden, encoder_outputs, mask, attn_w, attn_b, v_w, *,
                      batch_tile=None, compute_dtype=jnp.bfloat16,
                      out_dtype=jnp.float32, encoder_batch_first=False):
    """Pointer-network attention forward.

    hidden: [B, H]; encoder_outputs: [S, B, E2] (or [B, S, E2] when
    encoder_batch_first=True, eliminating the wrapper transpose pass);
    mask: [B, S]; attn_w: [H, H + E2] (PyTorch Linear weight, hidden columns
    first); attn_b: [H]; v_w: [1, H].

    compute_dtype feeds the MXU / encoder DMA (bf16 default on every TPU
    generation; accumulation and the softmax stay f32).  out_dtype may be bf16
    if downstream tolerates it (halves output writeback).
    """
    if encoder_batch_first:
        B, S, E2 = encoder_outputs.shape
        enc_bf = encoder_outputs.astype(compute_dtype)
    else:
        S, B, E2 = encoder_outputs.shape
        # cast BEFORE the transpose so the relayout copy moves half the bytes.
        enc_bf = jnp.transpose(encoder_outputs.astype(compute_dtype), (1, 0, 2))
    H = hidden.shape[1]

    gen = _tpu_generation()
    cdt = jax.dtypes.canonicalize_dtype(compute_dtype)
    itemsize = cdt.itemsize
    rowwise = H < 128                                   # lane-dense small-H path
    use_bf16_acts = (gen >= 6 and cdt.name == "bfloat16")
    act_dtype = jnp.bfloat16 if use_bf16_acts else jnp.float32

    S_pad = _round_up(S, 128)                           # lane-dense scores/output
    TB, vmem_limit = _select_tile(B, S_pad, E2, H, itemsize, gen, batch_tile,
                                  rowwise)
    B_pad = _round_up(B, TB)

    enc_p = jnp.pad(enc_bf, ((0, B_pad - B), (0, S_pad - S), (0, 0)))
    hid_p = jnp.pad(hidden.astype(compute_dtype), ((0, B_pad - B), (0, 0)))
    mask_p = jnp.pad(mask != 0, ((0, B_pad - B), (0, S_pad - S)))
    # additive mask bias: 0 for valid, -1e10 for masked / padded positions.
    mask_bias = jnp.where(mask_p, 0.0, _NEG_BIG).astype(jnp.float32)

    # split Linear weight (PyTorch (out, in) layout; hidden columns first,
    # matching torch.cat((hidden, encoder_outputs), dim=2)).
    wh_t = attn_w[:, :H].astype(compute_dtype)          # (H, H)
    we_t = attn_w[:, H:].astype(compute_dtype)          # (H, E2)

    if rowwise:
        kernel = functools.partial(_attention_kernel_rowwise, act_dtype=act_dtype)
        pshape = (H, 1)
    else:
        kernel = functools.partial(_attention_kernel_batched, act_dtype=act_dtype)
        pshape = (1, H)
    b_param = attn_b.reshape(pshape).astype(jnp.float32)
    v_param = v_w.reshape(pshape).astype(jnp.float32)

    cp_kwargs = dict(dimension_semantics=("parallel",))
    if vmem_limit is not None:
        cp_kwargs["vmem_limit_bytes"] = vmem_limit

    out = pl.pallas_call(
        kernel,
        out_shape=jax.ShapeDtypeStruct((B_pad, S_pad), jnp.dtype(out_dtype)),
        grid_spec=pltpu.PrefetchScalarGridSpec(
            num_scalar_prefetch=0,
            grid=(B_pad // TB,),
            in_specs=[
                pl.BlockSpec((TB, H), lambda b: (b, 0)),             # hidden
                pl.BlockSpec((TB, S_pad, E2), lambda b: (b, 0, 0)),  # encoder
                pl.BlockSpec((H, H), lambda b: (0, 0)),              # Wh (const)
                pl.BlockSpec((H, E2), lambda b: (0, 0)),             # We (const)
                pl.BlockSpec(pshape, lambda b: (0, 0)),              # bias (const)
                pl.BlockSpec(pshape, lambda b: (0, 0)),              # v    (const)
                pl.BlockSpec((TB, S_pad), lambda b: (b, 0)),         # mask bias
            ],
            out_specs=pl.BlockSpec((TB, S_pad), lambda b: (b, 0)),
        ),
        compiler_params=pltpu.CompilerParams(**cp_kwargs),
    )(hid_p, enc_p, wh_t, we_t, b_param, v_param, mask_bias)

    return out[:B, :S]


# ---------------------------------------------------------------------------
# Reference + self-test
# ---------------------------------------------------------------------------

def _reference(hidden, encoder_outputs, mask, attn_w, attn_b, v_w):
    h_rep = jnp.repeat(hidden[:, None, :], encoder_outputs.shape[0], axis=1)
    enc = jnp.transpose(encoder_outputs, (1, 0, 2))
    energy = jnp.tanh(jnp.concatenate([h_rep, enc], axis=2) @ attn_w.T + attn_b)
    attention = (energy @ v_w.T)[..., 0]
    attention = jnp.where(mask == 0, _NEG_BIG, attention)
    return jax.nn.softmax(attention, axis=1)


def _run_case(batch, src_len, enc_hid_dim, dec_hid_dim, seed):
    E2 = enc_hid_dim * 2
    in_dim = E2 + dec_hid_dim
    key = jax.random.PRNGKey(seed)
    k_h, k_e, k_m, k_w1, k_b1, k_v = jax.random.split(key, 6)

    hidden = jax.random.normal(k_h, (batch, dec_hid_dim), jnp.float32)
    encoder_outputs = jax.random.normal(k_e, (src_len, batch, E2), jnp.float32)
    mask = (jax.random.uniform(k_m, (batch, src_len)) > 0.3).astype(jnp.int32)
    mask = mask.at[:, 0].set(1)   # all-masked rows are a documented divergence

    bound1 = 1.0 / (in_dim ** 0.5)
    attn_w = jax.random.uniform(k_w1, (dec_hid_dim, in_dim), jnp.float32,
                                -bound1, bound1)
    attn_b = jax.random.uniform(k_b1, (dec_hid_dim,), jnp.float32,
                                -bound1, bound1)
    bound2 = 1.0 / (dec_hid_dim ** 0.5)
    v_w = jax.random.uniform(k_v, (1, dec_hid_dim), jnp.float32,
                             -bound2, bound2)

    ref = _reference(hidden, encoder_outputs, mask, attn_w, attn_b, v_w)

    # f32 everywhere: tight check.
    out_f32 = jax.block_until_ready(
        attention_forward(hidden, encoder_outputs, mask, attn_w, attn_b, v_w,
                          compute_dtype=jnp.float32))
    assert out_f32.shape == (batch, src_len)
    assert jnp.allclose(out_f32, ref, atol=1e-4, rtol=1e-4), "f32 mismatch vs reference"

    # default path: bf16 MXU inputs (+ bf16 tanh on v6e/v7x), looser tolerance.
    out_bf16 = jax.block_until_ready(
        attention_forward(hidden, encoder_outputs, mask, attn_w, attn_b, v_w))
    assert out_bf16.shape == (batch, src_len)
    assert jnp.allclose(out_bf16, ref, atol=3e-2, rtol=3e-2), "bf16 mismatch vs reference"


if __name__ == "__main__":
    # H < 128 -> row-wise lane-dense path
    _run_case(batch=2, src_len=8, enc_hid_dim=16, dec_hid_dim=32, seed=0)
    # H >= 128 -> batched path
    _run_case(batch=2, src_len=8, enc_hid_dim=64, dec_hid_dim=128, seed=1)
    print("KERNEL_OK")
</pallas_src>

<mosaic_0001>
module attributes {stable_mosaic.version = 11 : i64} {
  func.func @_attention_kernel_rowwise(%arg0: i32, %arg1: memref<8x32xf32, #tpu.memory_space<vmem>>, %arg2: memref<8x128x32xf32, #tpu.memory_space<vmem>>, %arg3: memref<32x32xf32, #tpu.memory_space<vmem>>, %arg4: memref<32x32xf32, #tpu.memory_space<vmem>>, %arg5: memref<32x1xf32, #tpu.memory_space<vmem>>, %arg6: memref<32x1xf32, #tpu.memory_space<vmem>>, %arg7: memref<8x128xf32, #tpu.memory_space<vmem>>, %arg8: memref<8x128xf32, #tpu.memory_space<vmem>>) attributes {dimension_semantics = [#tpu.dimension_semantics<parallel>], iteration_bounds = array<i64: 1>, scalar_prefetch = 0 : i64, scratch_operands = 0 : i64, tpu.core_type = #tpu.core_type<tc>, window_params = [{transform_indices = @transform_0, window_bounds = array<i64: 8, 32>}, {transform_indices = @transform_1, window_bounds = array<i64: 8, 128, 32>}, {pipeline_mode = #tpu.pipeline_mode<synchronous>, transform_indices = @transform_2, window_bounds = array<i64: 32, 32>}, {pipeline_mode = #tpu.pipeline_mode<synchronous>, transform_indices = @transform_3, window_bounds = array<i64: 32, 32>}, {pipeline_mode = #tpu.pipeline_mode<synchronous>, transform_indices = @transform_4, window_bounds = array<i64: 32, 1>}, {pipeline_mode = #tpu.pipeline_mode<synchronous>, transform_indices = @transform_5, window_bounds = array<i64: 32, 1>}, {transform_indices = @transform_6, window_bounds = array<i64: 8, 128>}, {transform_indices = @transform_7, window_bounds = array<i64: 8, 128>}]} {
    %c0 = arith.constant 0 : index
    %c0_0 = arith.constant 0 : index
    %0 = vector.load %arg4[%c0, %c0_0] : memref<32x32xf32, #tpu.memory_space<vmem>>, vector<32x32xf32>
    %c0_1 = arith.constant 0 : index
    %c0_2 = arith.constant 0 : index
    %1 = vector.load %arg3[%c0_1, %c0_2] : memref<32x32xf32, #tpu.memory_space<vmem>>, vector<32x32xf32>
    %c0_3 = arith.constant 0 : index
    %c0_4 = arith.constant 0 : index
    %2 = vector.load %arg5[%c0_3, %c0_4] : memref<32x1xf32, #tpu.memory_space<vmem>>, vector<32x1xf32>
    %c0_5 = arith.constant 0 : index
    %c0_6 = arith.constant 0 : index
    %3 = vector.load %arg6[%c0_5, %c0_6] : memref<32x1xf32, #tpu.memory_space<vmem>>, vector<32x1xf32>
    %c0_i32 = arith.constant 0 : i32
    %c8_i32 = arith.constant 8 : i32
    %4 = arith.addi %c0_i32, %c8_i32 : i32
    %c1_i32 = arith.constant 1 : i32
    scf.for %arg9 = %c0_i32 to %4 step %c1_i32  : i32 {
      %c1_i32_8 = arith.constant 1 : i32
      %5 = arith.muli %arg9, %c1_i32_8 : i32
      %c0_i32_9 = arith.constant 0 : i32
      %6 = arith.addi %c0_i32_9, %5 : i32
      %7 = arith.index_cast %6 : i32 to index
      %c0_10 = arith.constant 0 : index
      %c0_11 = arith.constant 0 : index
      %8 = vector.load %arg2[%7, %c0_10, %c0_11] : memref<8x128x32xf32, #tpu.memory_space<vmem>>, vector<1x128x32xf32>
      %9 = vector.shape_cast %8 : vector<1x128x32xf32> to vector<128x32xf32>
      %10 = arith.index_cast %6 : i32 to index
      %c0_12 = arith.constant 0 : index
      %11 = vector.load %arg1[%10, %c0_12] : memref<8x32xf32, #tpu.memory_space<vmem>>, vector<1x32xf32>
      %12 = vector.broadcast %11 : vector<1x32xf32> to vector<32x32xf32>
      %13 = arith.mulf %1, %12 : vector<32x32xf32>
      %cst = arith.constant dense<0.000000e+00> : vector<32xf32>
      %14 = vector.multi_reduction <add>, %13, %cst [1] : vector<32x32xf32> to vector<32xf32>
      %15 = vector.shape_cast %14 : vector<32xf32> to vector<32x1xf32>
      %16 = arith.addf %15, %2 : vector<32x1xf32>
      %cst_13 = arith.constant dense<0.000000e+00> : vector<32x128xf32>
      %17 = tpu.matmul %0, %9, %cst_13 {dimension_numbers = #tpu.dot_dimension_numbers<[1], [1], [0], [0], [0, 0, 1, 0], [], []>} : vector<32x32xf32>, vector<128x32xf32>, vector<32x128xf32> -> vector<32x128xf32>
      %18 = vector.broadcast %16 : vector<32x1xf32> to vector<32x128xf32>
      %19 = arith.addf %17, %18 : vector<32x128xf32>
      %20 = math.tanh %19 : vector<32x128xf32>
      %21 = vector.broadcast %3 : vector<32x1xf32> to vector<32x128xf32>
      %22 = arith.mulf %20, %21 : vector<32x128xf32>
      %cst_14 = arith.constant dense<0.000000e+00> : vector<128xf32>
      %23 = vector.multi_reduction <add>, %22, %cst_14 [0] : vector<32x128xf32> to vector<128xf32>
      %24 = vector.shape_cast %23 : vector<128xf32> to vector<1x128xf32>
      %25 = arith.index_cast %6 : i32 to index
      %c0_15 = arith.constant 0 : index
      %26 = vector.load %arg7[%25, %c0_15] : memref<8x128xf32, #tpu.memory_space<vmem>>, vector<1x128xf32>
      %27 = arith.addf %24, %26 : vector<1x128xf32>
      %cst_16 = arith.constant dense<0xFF800000> : vector<1xf32>
      %28 = vector.multi_reduction <maximumf>, %27, %cst_16 [1] : vector<1x128xf32> to vector<1xf32>
      %29 = vector.shape_cast %28 : vector<1xf32> to vector<1x1xf32>
      %30 = vector.broadcast %29 : vector<1x1xf32> to vector<1x128xf32>
      %31 = arith.subf %27, %30 : vector<1x128xf32>
      %32 = math.exp %31 : vector<1x128xf32>
      %cst_17 = arith.constant dense<0.000000e+00> : vector<1xf32>
      %33 = vector.multi_reduction <add>, %32, %cst_17 [1] : vector<1x128xf32> to vector<1xf32>
      %34 = vector.shape_cast %33 : vector<1xf32> to vector<1x1xf32>
      %35 = tpu.reciprocal %34 {approx = true} : vector<1x1xf32> -> vector<1x1xf32>
      %36 = arith.mulf %34, %35 : vector<1x1xf32>
      %cst_18 = arith.constant 2.000000e+00 : f32
      %37 = vector.broadcast %cst_18 : f32 to vector<1x1xf32>
      %38 = arith.subf %37, %36 : vector<1x1xf32>
      %39 = arith.mulf %35, %38 : vector<1x1xf32>
      %40 = vector.broadcast %39 : vector<1x1xf32> to vector<1x128xf32>
      %41 = arith.mulf %32, %40 : vector<1x128xf32>
      %42 = arith.index_cast %6 : i32 to index
      %c0_19 = arith.constant 0 : index
      %43 = vector.load %arg8[%42, %c0_19] : memref<8x128xf32, #tpu.memory_space<vmem>>, vector<1x128xf32>
      tpu.vector_store %arg8[%42, %c0_19], %41 {strides = array<i32>} : memref<8x128xf32, #tpu.memory_space<vmem>>, vector<1x128xf32>,
    }
    %c8_i32_7 = arith.constant 8 : i32
    return
  }
  func.func @transform_0(%arg0: i32) -> (i32, i32) {
    %c0_i32 = arith.constant 0 : i32
    %c0_i32_0 = arith.constant 0 : i32
    return %arg0, %c0_i32 : i32, i32
  }
  func.func @transform_1(%arg0: i32) -> (i32, i32, i32) {
    %c0_i32 = arith.constant 0 : i32
    %c0_i32_0 = arith.constant 0 : i32
    %c0_i32_1 = arith.constant 0 : i32
    return %arg0, %c0_i32, %c0_i32_0 : i32, i32, i32
  }
  func.func @transform_2(%arg0: i32) -> (i32, i32) {
    %c0_i32 = arith.constant 0 : i32
    %c0_i32_0 = arith.constant 0 : i32
    %c0_i32_1 = arith.constant 0 : i32
    return %c0_i32, %c0_i32_0 : i32, i32
  }
  func.func @transform_3(%arg0: i32) -> (i32, i32) {
    %c0_i32 = arith.constant 0 : i32
    %c0_i32_0 = arith.constant 0 : i32
    %c0_i32_1 = arith.constant 0 : i32
    return %c0_i32, %c0_i32_0 : i32, i32
  }
  func.func @transform_4(%arg0: i32) -> (i32, i32) {
    %c0_i32 = arith.constant 0 : i32
    %c0_i32_0 = arith.constant 0 : i32
    %c0_i32_1 = arith.constant 0 : i32
    return %c0_i32, %c0_i32_0 : i32, i32
  }
  func.func @transform_5(%arg0: i32) -> (i32, i32) {
    %c0_i32 = arith.constant 0 : i32
    %c0_i32_0 = arith.constant 0 : i32
    %c0_i32_1 = arith.constant 0 : i32
    return %c0_i32, %c0_i32_0 : i32, i32
  }
  func.func @transform_6(%arg0: i32) -> (i32, i32) {
    %c0_i32 = arith.constant 0 : i32
    %c0_i32_0 = arith.constant 0 : i32
    return %arg0, %c0_i32 : i32, i32
  }
  func.func @transform_7(%arg0: i32) -> (i32, i32) {
    %c0_i32 = arith.constant 0 : i32
    %c0_i32_0 = arith.constant 0 : i32
    return %arg0, %c0_i32 : i32, i32
  }
}

</mosaic_0001>

<llo_original>
// kernel: attention_forward.1
$region0: #{attention_forward.1}
  #allocation0 [shape = 'u32[]', space=smem, size = 0x4, offset = 0x4, fixed_abs, tag = 'smem constant byte address 0x4 - core index']
  #allocation1 [shape = 'u32[72,128]{1,0:T(1,128)}', space=vmem, size = 0x9000, scoped, tag = 'internal scratch']
  %s0 = inlined_call_operand.vmem [shape: f32[8,32], index: 0, kind: input, shape index: {}]
  %s1 = inlined_call_operand.vmem [shape: f32[8,128,32], index: 1, kind: input, shape index: {}]
  %s2 = inlined_call_operand.vmem [shape: f32[32,32], index: 2, kind: input, shape index: {}]
  %s3 = inlined_call_operand.vmem [shape: f32[32,32], index: 3, kind: input, shape index: {}]
  %s4 = inlined_call_operand.vmem [shape: f32[32,1], index: 4, kind: input, shape index: {}]
  %s5 = inlined_call_operand.vmem [shape: f32[32,1], index: 5, kind: input, shape index: {}]
  %s6 = inlined_call_operand.vmem [shape: f32[8,128], index: 6, kind: input, shape index: {}]
  %s7 = inlined_call_operand.vmem [shape: f32[8,128], index: 7, kind: output, shape index: {}]
  %s8 = sld [smem:[#allocation0]]
  $region45: #{attention_forward.1} parent=0
    _
  %s10 = ssub.s32 1, %s8
  %s11 = scalar_select 0, %s10, %s8
  // Predicated region
  $region2: #{attention_forward.1} parent=0 // pred_check
    _
  $region3: #{attention_forward.1} parent=0 // pred_check_branch
    %13 = sbr.rel (0) target = $region5
  $region4: #{attention_forward.1} parent=0 // pred_region
    _
  $region5: #{attention_forward.1} parent=0 // pred_fallthru
    _
  // Predicated region
  $region6: #{attention_forward.1} parent=0 // pred_check
    _
  $region7: #{attention_forward.1} parent=0 // pred_check_branch
    %15 = sbr.rel (0) target = $region9
  $region8: #{attention_forward.1} parent=0 // pred_region
    _
  $region9: #{attention_forward.1} parent=0 // pred_fallthru
    _
  // Predicated region
  $region10: #{attention_forward.1} parent=0 // pred_check
    _
  $region11: #{attention_forward.1} parent=0 // pred_check_branch
    %17 = sbr.rel (0) target = $region13
  $region12: #{attention_forward.1} parent=0 // pred_region
    _
  $region13: #{attention_forward.1} parent=0 // pred_fallthru
    _
  // Predicated region
  $region14: #{attention_forward.1} parent=0 // pred_check
    _
  $region15: #{attention_forward.1} parent=0 // pred_check_branch
    %19 = sbr.rel (0) target = $region17
  $region16: #{attention_forward.1} parent=0 // pred_region
    _
  $region17: #{attention_forward.1} parent=0 // pred_fallthru
    _
  // Predicated region
  $region18: #{attention_forward.1} parent=0 // pred_check
    _
  $region19: #{attention_forward.1} parent=0 // pred_check_branch
    %21 = sbr.rel (0) target = $region21
  $region20: #{attention_forward.1} parent=0 // pred_region
    _
  $region21: #{attention_forward.1} parent=0 // pred_fallthru
    _
  // Predicated region
  $region22: #{attention_forward.1} parent=0 // pred_check
    _
  $region23: #{attention_forward.1} parent=0 // pred_check_branch
    %23 = sbr.rel (0) target = $region25
  $region24: #{attention_forward.1} parent=0 // pred_region
    _
  $region25: #{attention_forward.1} parent=0 // pred_fallthru
    _
  // Predicated region
  $region26: #{attention_forward.1} parent=0 // pred_check
    _
  $region27: #{attention_forward.1} parent=0 // pred_check_branch
    %25 = sbr.rel (0) target = $region29
  $region28: #{attention_forward.1} parent=0 // pred_region
    _
  $region29: #{attention_forward.1} parent=0 // pred_fallthru
    _
  %v26 = vld [vmem:[%s3] sm:$0xff]
  %v27 = vld [vmem:[%s3 + $0x8] sm:$0xff]
  %v28 = vld [vmem:[%s3 + $0x10] sm:$0xff]
  %v29 = vld [vmem:[%s3 + $0x18] sm:$0xff]
  %v30 = vld [vmem:[%s2] sm:$0xff]
  %v31 = vld [vmem:[%s2 + $0x8] sm:$0xff]
  %v32 = vld [vmem:[%s2 + $0x10] sm:$0xff]
  %v33 = vld [vmem:[%s2 + $0x18] sm:$0xff]
  %v34 = vld [vmem:[%s4] sm:$0xff]
  %v35 = vld [vmem:[%s4 + $0x8] sm:$0xff]
  %v36 = vld [vmem:[%s4 + $0x10] sm:$0xff]
  %v37 = vld [vmem:[%s4 + $0x18] sm:$0xff]
  %v38 = vld [vmem:[%s5] sm:$0xff]
  %v39 = vld [vmem:[%s5 + $0x8] sm:$0xff]
  %v40 = vld [vmem:[%s5 + $0x10] sm:$0xff]
  %v41 = vld [vmem:[%s5 + $0x18] sm:$0xff]
  loop: start=0, step=1, limit=8
  $region30: #{attention_forward.1} parent=0 // loop_pre_header
    _
  $region31: #{attention_forward.1} parent=0 // loop_header
    %s43 = sphi 0, %s47
    %p44 = scmp.ge.s32.totalorder %s43, 8
  $region32: #{attention_forward.1} parent=0 // loop_header_branch
    %46 = sbr.rel (%p44) target = $region36
  $region33: #{attention_forward.1} parent=0 // loop_body
    %s48 = smul.u32 %s43, 128
    %s49 = scalar_lea.vmem %s1, %s48
    %v50 = vld [vmem:[%s49] sm:$0xff]
    %v51 = vld [vmem:[%s49 + $0x8] sm:$0xff]
    %v52 = vld [vmem:[%s49 + $0x10] sm:$0xff]
    %v53 = vld [vmem:[%s49 + $0x18] sm:$0xff]
    %v54 = vld [vmem:[%s49 + $0x20] sm:$0xff]
    %v55 = vld [vmem:[%s49 + $0x28] sm:$0xff]
    %v56 = vld [vmem:[%s49 + $0x30] sm:$0xff]
    %v57 = vld [vmem:[%s49 + $0x38] sm:$0xff]
    %v58 = vld [vmem:[%s49 + $0x40] sm:$0xff]
    %v59 = vld [vmem:[%s49 + $0x48] sm:$0xff]
    %v60 = vld [vmem:[%s49 + $0x50] sm:$0xff]
    %v61 = vld [vmem:[%s49 + $0x58] sm:$0xff]
    %v62 = vld [vmem:[%s49 + $0x60] sm:$0xff]
    %v63 = vld [vmem:[%s49 + $0x68] sm:$0xff]
    %v64 = vld [vmem:[%s49 + $0x70] sm:$0xff]
    %v65 = vld [vmem:[%s49 + $0x78] sm:$0xff]
    %s66 = scalar_lea.vmem %s0, %s43
    %v67 = vld [vmem:[%s66] sm:$0x1]
    %v68 = vperm.slane %v67, 0
    %v69 = vmul.f32 %v30, %v68
    %v70 = vmul.f32 %v31, %v68
    %v71 = vmul.f32 %v32, %v68
    %v72 = vmul.f32 %v33, %v68
    %vm73 = vcmask 261120
    %v74 = vsel %vm73, %v69, 0.0
    %75 = vadd.xlane.f32.xlu0 %v74
    %v76 = vpop.xlane.xlu0 %75
    %v77 = vsel %vm73, %v70, 0.0
    %78 = vadd.xlane.f32.xlu0 %v77
    %v79 = vpop.xlane.xlu0 %78
    %v80 = vsel %vm73, %v71, 0.0
    %81 = vadd.xlane.f32.xlu0 %v80
    %v82 = vpop.xlane.xlu0 %81
    %v83 = vsel %vm73, %v72, 0.0
    %84 = vadd.xlane.f32.xlu0 %v83
    %v85 = vpop.xlane.xlu0 %84
    %v86 = vadd.f32 %v76, %v34
    %v87 = vadd.f32 %v79, %v35
    %v88 = vadd.f32 %v82, %v36
    %v89 = vadd.f32 %v85, %v37
    %91 = vset.pattern.permute.xlu0 0
    %92 = vperm.xlu0 %91, %v86
    %v93 = vpop.permute.xlu0 %92
    %96 = vset.pattern.permute.xlu0 0
    %97 = vperm.xlu0 %96, %v87
    %v98 = vpop.permute.xlu0 %97
    %101 = vset.pattern.permute.xlu0 0
    %102 = vperm.xlu0 %101, %v88
    %v103 = vpop.permute.xlu0 %102
    %106 = vset.pattern.permute.xlu0 0
    %107 = vperm.xlu0 %106, %v89
    %v108 = vpop.permute.xlu0 %107
    %v111 = vsel %vm73, %v26, 0
    %v114 = vsel %vm73, %v27, 0
    %v117 = vsel %vm73, %v28, 0
    %v120 = vsel %vm73, %v29, 0
    %v123 = vsel %vm73, %v50, 0
    %v126 = vsel %vm73, %v51, 0
    %v129 = vsel %vm73, %v52, 0
    %v132 = vsel %vm73, %v53, 0
    %v135 = vsel %vm73, %v54, 0
    %v138 = vsel %vm73, %v55, 0
    %v141 = vsel %vm73, %v56, 0
    %v144 = vsel %vm73, %v57, 0
    %v147 = vsel %vm73, %v58, 0
    %v150 = vsel %vm73, %v59, 0
    %v153 = vsel %vm73, %v60, 0
    %v156 = vsel %vm73, %v61, 0
    %v159 = vsel %vm73, %v62, 0
    %v162 = vsel %vm73, %v63, 0
    %v165 = vsel %vm73, %v64, 0
    %v168 = vsel %vm73, %v65, 0
    %170 = vmatpush.xpose.msra.mxu0 %v168
    %171 = vmatpush.xpose.msra.mxu0 %v165
    %172 = vmatpush.xpose.msra.mxu0 %v162
    %173 = vmatpush.xpose.msra.mxu0 %v159
    %174 = vmatpush.xpose.msra.mxu0 %v156
    %175 = vmatpush.xpose.msra.mxu0 %v153
    %176 = vmatpush.xpose.msra.mxu0 %v150
    %177 = vmatpush.xpose.msra.mxu0 %v147
    %178 = vmatpush.xpose.msra.mxu0 %v144
    %179 = vmatpush.xpose.msra.mxu0 %v141
    %180 = vmatpush.xpose.msra.mxu0 %v138
    %181 = vmatpush.xpose.msra.mxu0 %v135
    %182 = vmatpush.xpose.msra.mxu0 %v132
    %183 = vmatpush.xpose.msra.mxu0 %v129
    %184 = vmatpush.xpose.msra.mxu0 %v126
    %185 = vmatpush.xpose.msra.mxu0 %v123
    %186 = vmatmul.f32.gmra.mxu0 %v111
    %v187 = vpop.f32.mrf.mxu0
    %v188 = vadd.f32 %v93, %v187
    %189 = vmatmul.f32.gmra.mxu0 %v114
    %v190 = vpop.f32.mrf.mxu0
    %v191 = vadd.f32 %v98, %v190
    %192 = vmatmul.f32.gmra.mxu0 %v117
    %v193 = vpop.f32.mrf.mxu0
    %v194 = vadd.f32 %v103, %v193
    %195 = vmatmul.f32.gmra.mxu0 %v120
    %v196 = vpop.f32.mrf.mxu0
    %v197 = vadd.f32 %v108, %v196
    %198 = vdwg.mxu0
    %v199 = vtanh.pop %v188
    %v200 = vtanh.pop %v191
    %v201 = vtanh.pop %v194
    %v202 = vtanh.pop %v197
    %204 = vset.pattern.permute.xlu0 0
    %205 = vperm.xlu0 %204, %v38
    %v206 = vpop.permute.xlu0 %205
    %209 = vset.pattern.permute.xlu0 0
    %210 = vperm.xlu0 %209, %v39
    %v211 = vpop.permute.xlu0 %210
    %214 = vset.pattern.permute.xlu0 0
    %215 = vperm.xlu0 %214, %v40
    %v216 = vpop.permute.xlu0 %215
    %219 = vset.pattern.permute.xlu0 0
    %220 = vperm.xlu0 %219, %v41
    %v221 = vpop.permute.xlu0 %220
    %v223 = vmul.f32 %v199, %v206
    %v224 = vmul.f32 %v200, %v211
    %v225 = vmul.f32 %v201, %v216
    %v226 = vmul.f32 %v202, %v221
    %v227 = vadd.f32 %v223, %v224
    %v228 = vadd.f32 %v227, %v225
    %v229 = vadd.f32 %v228, %v226
    %v230 = vrot.slane %v229, 4
    %v231 = vadd.f32 %v229, %v230
    %v232 = vrot.slane %v231, 2
    %v233 = vadd.f32 %v231, %v232
    %v234 = vrot.slane %v233, 1
    %v235 = vadd.f32 %v233, %v234
    %s236 = scalar_lea.vmem %s6, %s43
    %v237 = vld [vmem:[%s236] sm:$0x1]
    %v238 = vadd.f32 %v235, %v237
    %vm239 = vcmask 1040384
    %v240 = vsel %vm239, %v238, -inf
    %241 = vmax.xlane.f32.xlu0 %v240
    %v242 = vpop.xlane.xlu0 %241
    %v243 = vsub.f32 %v238, %v242
    %v244 = vmul.f32 %v243, 1.442695
    %v245 = vpow.pop %v244
    %v246 = vsel %vm239, %v245, 0.0
    %247 = vadd.xlane.f32.xlu0 %v246
    %v248 = vpop.xlane.xlu0 %247
    %v249 = vrcp.pop %v248
    %v250 = vmul.f32 %v248, %v249
    %v251 = vsub.f32 2.0, %v250
    %v252 = vmul.f32 %v249, %v251
    %v253 = vmul.f32 %v245, %v252
    %s254 = scalar_lea.vmem %s7, %s43
    %255 = vst [vmem:[%s254] sm:$0x1] %v253
  $region34: #{attention_forward.1} parent=0 // loop_footer
    %s47 = sadd.s32 1, %s43
  $region35: #{attention_forward.1} parent=0 // loop_footer_branch
    %42 = sbr.rel target = $region31
  $region36: #{attention_forward.1} parent=0 // loop_exit
    _
  // Predicated region
  $region37: #{attention_forward.1} parent=0 // pred_check
    _
  $region38: #{attention_forward.1} parent=0 // pred_check_branch
    %257 = sbr.rel (0) target = $region40
  $region39: #{attention_forward.1} parent=0 // pred_region
    _
  $region40: #{attention_forward.1} parent=0 // pred_fallthru
    _
  // Predicated region
  $region41: #{attention_forward.1} parent=0 // pred_check
    _
  $region42: #{attention_forward.1} parent=0 // pred_check_branch
    %259 = sbr.rel (0) target = $region44
  $region43: #{attention_forward.1} parent=0 // pred_region
    _
  $region44: #{attention_forward.1} parent=0 // pred_fallthru
    _

</llo_original>
